<compile_context>
chip_gen: v5e
topology: v5e:2x2
jax: 0.10.0
libtpu: 0.0.40
codegen_flags: <defaults>
</compile_context>

<pallas_src>
import jax
import jax.numpy as jnp
from jax import lax
from jax.experimental import pallas as pl
from jax.experimental.pallas import tpu as pltpu


def _clip_loss_kernel(lt_ref, sim_ref, diag_ref, out_ref,
                      col_max_ref, col_sum_ref, row_acc_ref, diag_acc_ref):
    # lt_ref:   SMEM (1,) f32      — logit_temperature parameter
    # sim_ref:  VMEM (TM, N)       — row tile of the similarity matrix
    # diag_ref: VMEM (TM, TM)      — diagonal sub-block of the same row tile
    # out_ref:  VMEM (1, 1) f32    — scalar loss (written on last tile)
    # scratch:  col_max/col_sum (1, N) f32, row_acc/diag_acc (1, 1) f32
    i = pl.program_id(0)
    last = pl.num_programs(0) - 1

    @pl.when(i == 0)
    def _init():
        col_max_ref[...] = jnp.full_like(col_max_ref, -jnp.inf)
        col_sum_ref[...] = jnp.zeros_like(col_sum_ref)
        row_acc_ref[...] = jnp.zeros_like(row_acc_ref)
        diag_acc_ref[...] = jnp.zeros_like(diag_acc_ref)
        out_ref[...] = jnp.zeros_like(out_ref)

    lt = lt_ref[0]
    # temperature = sigmoid(lt)  =>  1 / temperature = 1 + exp(-lt)
    inv_temp = 1.0 + jnp.exp(-lt)

    logits = sim_ref[...].astype(jnp.float32) * inv_temp        # (TM, N), f32
    tm = logits.shape[0]
    n = logits.shape[1]

    # ---- dim=1 (per-row) logsumexp: exact within this row tile -------------
    row_max = jnp.max(logits, axis=1, keepdims=True)            # (TM, 1)
    row_sum = jnp.sum(jnp.exp(logits - row_max), axis=1, keepdims=True)
    lse_row = jnp.log(row_sum) + row_max                        # (TM, 1)
    row_acc_ref[...] = row_acc_ref[...] + jnp.sum(lse_row)

    # ---- dim=0 (per-column) logsumexp: online accumulation ------------------
    tile_max = jnp.max(logits, axis=0, keepdims=True)           # (1, N)
    new_max = jnp.maximum(col_max_ref[...], tile_max)           # (1, N)
    rescale = jnp.exp(col_max_ref[...] - new_max)               # exp(-inf)->0 on 1st tile
    col_sum_ref[...] = (col_sum_ref[...] * rescale
                        + jnp.sum(jnp.exp(logits - new_max), axis=0, keepdims=True))
    col_max_ref[...] = new_max

    # ---- diagonal of the scaled logits: only the (TM, TM) diagonal block ----
    dblk = diag_ref[...].astype(jnp.float32) * inv_temp         # (TM, TM)
    rid = lax.broadcasted_iota(jnp.int32, (tm, tm), 0)
    cid = lax.broadcasted_iota(jnp.int32, (tm, tm), 1)
    diag_acc_ref[...] = diag_acc_ref[...] + jnp.sum(jnp.where(rid == cid, dblk, 0.0))

    # ---- finalize ------------------------------------------------------------
    @pl.when(i == last)
    def _finalize():
        lse_col = jnp.log(col_sum_ref[...]) + col_max_ref[...]  # (1, N)
        n_f = jnp.float32(n)
        total = 0.5 * (row_acc_ref[...] + jnp.sum(lse_col)) - diag_acc_ref[...]
        out_ref[...] = total / n_f


def _tile_vmem_bytes(tm: int, n: int, itemsize: int) -> int:
    # Double-buffered (TM, N) row tile + (TM, TM) diag block inputs,
    # (1, N) f32 accumulators (padded to 8 sublanes), small scalar scratch.
    return 2 * (tm * n + tm * tm) * itemsize + 2 * 8 * n * 4 + (1 << 20)


def _pick_tile_rows(n: int, itemsize: int) -> int:
    # Row-tile sizes that keep the (TM, TM) diagonal block lane-aligned
    # ((8, 128) tiling rule) while streaming the matrix through VMEM.
    # Budget is conservative so the same choice fits v7x's 64 MiB VMEM.
    budget = 40 * 2**20
    candidates = [tm for tm in (512, 256, 128) if n % tm == 0]
    for tm in candidates:
        if _tile_vmem_bytes(tm, n, itemsize) <= budget:
            return tm
    if candidates:
        return candidates[-1]
    # TODO(synk): support ragged N (pad + mask the last row tile); for now fall
    # back to a single whole-matrix tile, which is fine for small/odd N.
    return n


def clip_loss(similarity_matrix: jax.Array,
              logit_temperature: jax.Array,
              *,
              tile_rows: int | None = None) -> jax.Array:
    """Pallas implementation of CLIPLoss.forward. Returns a scalar f32 loss."""
    n, m = similarity_matrix.shape
    assert n == m, "CLIP loss expects a square similarity matrix"

    itemsize = jnp.dtype(similarity_matrix.dtype).itemsize
    tm = _pick_tile_rows(n, itemsize) if tile_rows is None else int(tile_rows)
    if n % tm != 0:
        raise ValueError(f"tile_rows={tm} must divide N={n}")
    if tm != n and tm % 128 != 0:
        raise ValueError("tile_rows must be a multiple of 128 (or equal to N)")
    num_tiles = n // tm

    lt = jnp.reshape(jnp.asarray(logit_temperature, dtype=jnp.float32), (1,))

    vmem_needed = _tile_vmem_bytes(tm, n, itemsize) + (4 << 20)
    vmem_limit_bytes = int(min(128 * 2**20, max(32 * 2**20, vmem_needed)))

    cost = pl.CostEstimate(
        flops=int(6 * n * n),
        transcendentals=int(2 * n * n + 2 * n),
        bytes_accessed=int(n * n * itemsize + n * tm * itemsize + 4),
    )

    out = pl.pallas_call(
        _clip_loss_kernel,
        out_shape=jax.ShapeDtypeStruct((1, 1), jnp.float32),
        grid_spec=pltpu.PrefetchScalarGridSpec(
            num_scalar_prefetch=0,
            grid=(num_tiles,),
            in_specs=[
                pl.BlockSpec(memory_space=pltpu.MemorySpace.SMEM),   # logit_temperature
                pl.BlockSpec((tm, n), lambda i: (i, 0)),             # row tile
                pl.BlockSpec((tm, tm), lambda i: (i, i)),            # diagonal sub-block
            ],
            out_specs=pl.BlockSpec((1, 1), lambda i: (0, 0)),
            scratch_shapes=[
                pltpu.VMEM((1, n), jnp.float32),   # online column max
                pltpu.VMEM((1, n), jnp.float32),   # online column sum-exp
                pltpu.VMEM((1, 1), jnp.float32),   # sum of row LSEs
                pltpu.VMEM((1, 1), jnp.float32),   # sum of diagonal logits
            ],
        ),
        compiler_params=pltpu.CompilerParams(
            dimension_semantics=("arbitrary",),
            vmem_limit_bytes=vmem_limit_bytes,
        ),
        cost_estimate=cost,
    )(lt, similarity_matrix, similarity_matrix)
    return out[0, 0]


def _reference_clip_loss(sim, lt):
    """Pure-JAX reference for verification."""
    temperature = jax.nn.sigmoid(lt)
    logits = sim.astype(jnp.float32) / temperature
    caption = -jnp.mean(jnp.diag(jax.nn.log_softmax(logits, axis=0)))
    image = -jnp.mean(jnp.diag(jax.nn.log_softmax(logits, axis=1)))
    return 0.5 * (caption + image)


if __name__ == "__main__":
    key = jax.random.PRNGKey(0)
    k1, k2 = jax.random.split(key)

    # Deterministic parameter init matching nn.Parameter(torch.tensor(-1.0))
    logit_temperature = jnp.asarray(-1.0, dtype=jnp.float32)

    # Case 1: small single-tile matrix (tiny batch).
    sim_small = jax.random.normal(k1, (8, 8), dtype=jnp.float32)
    loss_small = jax.block_until_ready(clip_loss(sim_small, logit_temperature))
    ref_small = _reference_clip_loss(sim_small, logit_temperature)
    assert jnp.allclose(loss_small, ref_small, rtol=1e-4, atol=1e-4), (loss_small, ref_small)

    # Case 2: multi-tile (two row tiles of 128) — exercises the online
    # column-LSE accumulation and the init/finalize pl.when paths.
    sim_big = jax.random.normal(k2, (256, 256), dtype=jnp.float32)
    loss_big = jax.block_until_ready(clip_loss(sim_big, logit_temperature, tile_rows=128))
    ref_big = _reference_clip_loss(sim_big, logit_temperature)
    assert jnp.allclose(loss_big, ref_big, rtol=1e-4, atol=1e-4), (loss_big, ref_big)

    print("KERNEL_OK")
</pallas_src>

<mosaic_0001>
module attributes {stable_mosaic.version = 11 : i64} {
  func.func @_clip_loss_kernel(%arg0: i32, %arg1: memref<1xf32, #tpu.memory_space<smem>>, %arg2: memref<8x8xf32, #tpu.memory_space<vmem>>, %arg3: memref<8x8xf32, #tpu.memory_space<vmem>>, %arg4: memref<1x1xf32, #tpu.memory_space<vmem>>, %arg5: memref<1x8xf32, #tpu.memory_space<vmem>>, %arg6: memref<1x8xf32, #tpu.memory_space<vmem>>, %arg7: memref<1x1xf32, #tpu.memory_space<vmem>>, %arg8: memref<1x1xf32, #tpu.memory_space<vmem>>) attributes {dimension_semantics = [#tpu.dimension_semantics<arbitrary>], iteration_bounds = array<i64: 1>, scalar_prefetch = 0 : i64, scratch_operands = 4 : i64, tpu.core_type = #tpu.core_type<tc>, window_params = [{transform_indices = @transform_0, window_bounds = array<i64: 1>}, {transform_indices = @transform_1, window_bounds = array<i64: 8, 8>}, {transform_indices = @transform_2, window_bounds = array<i64: 8, 8>}, {pipeline_mode = #tpu.pipeline_mode<synchronous>, transform_indices = @transform_3, window_bounds = array<i64: 1, 1>}]} {
    %c0_i32 = arith.constant 0 : i32
    %0 = arith.cmpi eq, %arg0, %c0_i32 : i32
    %1 = arith.extui %0 : i1 to i32
    %c0_i32_0 = arith.constant 0 : i32
    %2 = arith.cmpi ne, %1, %c0_i32_0 : i32
    scf.if %2 {
      %cst_33 = arith.constant 0xFF800000 : f32
      %63 = vector.broadcast %cst_33 : f32 to vector<1x8xf32>
      %c0_34 = arith.constant 0 : index
      %c0_35 = arith.constant 0 : index
      %64 = vector.load %arg5[%c0_34, %c0_35] : memref<1x8xf32, #tpu.memory_space<vmem>>, vector<1x8xf32>
      tpu.vector_store %arg5[%c0_34, %c0_35], %63 {strides = array<i32>} : memref<1x8xf32, #tpu.memory_space<vmem>>, vector<1x8xf32>,
      %cst_36 = arith.constant 0.000000e+00 : f32
      %65 = vector.broadcast %cst_36 : f32 to vector<1x8xf32>
      %c0_37 = arith.constant 0 : index
      %c0_38 = arith.constant 0 : index
      %66 = vector.load %arg6[%c0_37, %c0_38] : memref<1x8xf32, #tpu.memory_space<vmem>>, vector<1x8xf32>
      tpu.vector_store %arg6[%c0_37, %c0_38], %65 {strides = array<i32>} : memref<1x8xf32, #tpu.memory_space<vmem>>, vector<1x8xf32>,
      %cst_39 = arith.constant 0.000000e+00 : f32
      %67 = vector.broadcast %cst_39 : f32 to vector<1x1xf32>
      %c0_40 = arith.constant 0 : index
      %c0_41 = arith.constant 0 : index
      %68 = vector.load %arg7[%c0_40, %c0_41] : memref<1x1xf32, #tpu.memory_space<vmem>>, vector<1x1xf32>
      tpu.vector_store %arg7[%c0_40, %c0_41], %67 {strides = array<i32>} : memref<1x1xf32, #tpu.memory_space<vmem>>, vector<1x1xf32>,
      %cst_42 = arith.constant 0.000000e+00 : f32
      %69 = vector.broadcast %cst_42 : f32 to vector<1x1xf32>
      %c0_43 = arith.constant 0 : index
      %c0_44 = arith.constant 0 : index
      %70 = vector.load %arg8[%c0_43, %c0_44] : memref<1x1xf32, #tpu.memory_space<vmem>>, vector<1x1xf32>
      tpu.vector_store %arg8[%c0_43, %c0_44], %69 {strides = array<i32>} : memref<1x1xf32, #tpu.memory_space<vmem>>, vector<1x1xf32>,
      %cst_45 = arith.constant 0.000000e+00 : f32
      %71 = vector.broadcast %cst_45 : f32 to vector<1x1xf32>
      %c0_46 = arith.constant 0 : index
      %c0_47 = arith.constant 0 : index
      %72 = vector.load %arg4[%c0_46, %c0_47] : memref<1x1xf32, #tpu.memory_space<vmem>>, vector<1x1xf32>
      tpu.vector_store %arg4[%c0_46, %c0_47], %71 {strides = array<i32>} : memref<1x1xf32, #tpu.memory_space<vmem>>, vector<1x1xf32>,
    } else {
    }
    %c0 = arith.constant 0 : index
    %3 = memref.load %arg1[%c0] : memref<1xf32, #tpu.memory_space<smem>>
    %cst = arith.constant 0.000000e+00 : f32
    %4 = arith.subf %cst, %3 : f32
    %5 = math.exp %4 : f32
    %cst_1 = arith.constant 1.000000e+00 : f32
    %6 = arith.addf %cst_1, %5 : f32
    %c0_2 = arith.constant 0 : index
    %c0_3 = arith.constant 0 : index
    %7 = vector.load %arg2[%c0_2, %c0_3] : memref<8x8xf32, #tpu.memory_space<vmem>>, vector<8x8xf32>
    %8 = vector.broadcast %6 : f32 to vector<8x8xf32>
    %9 = arith.mulf %7, %8 : vector<8x8xf32>
    %cst_4 = arith.constant dense<0xFF800000> : vector<8xf32>
    %10 = vector.multi_reduction <maximumf>, %9, %cst_4 [1] : vector<8x8xf32> to vector<8xf32>
    %11 = vector.shape_cast %10 : vector<8xf32> to vector<8x1xf32>
    %12 = vector.broadcast %11 : vector<8x1xf32> to vector<8x8xf32>
    %13 = arith.subf %9, %12 : vector<8x8xf32>
    %14 = math.exp %13 : vector<8x8xf32>
    %cst_5 = arith.constant dense<0.000000e+00> : vector<8xf32>
    %15 = vector.multi_reduction <add>, %14, %cst_5 [1] : vector<8x8xf32> to vector<8xf32>
    %16 = vector.shape_cast %15 : vector<8xf32> to vector<8x1xf32>
    %17 = math.log %16 : vector<8x1xf32>
    %18 = arith.addf %17, %11 : vector<8x1xf32>
    %c0_6 = arith.constant 0 : index
    %c0_7 = arith.constant 0 : index
    %19 = vector.load %arg7[%c0_6, %c0_7] : memref<1x1xf32, #tpu.memory_space<vmem>>, vector<1x1xf32>
    %20 = vector.shape_cast %18 : vector<8x1xf32> to vector<1x8x1xf32>
    %cst_8 = arith.constant dense<0.000000e+00> : vector<1xf32>
    %21 = vector.multi_reduction <add>, %20, %cst_8 [1, 2] : vector<1x8x1xf32> to vector<1xf32>
    %22 = vector.shape_cast %21 : vector<1xf32> to vector<1x1x1xf32>
    %23 = vector.extract %22[0, 0, 0] : f32 from vector<1x1x1xf32>
    %24 = vector.broadcast %23 : f32 to vector<1x1xf32>
    %25 = arith.addf %19, %24 : vector<1x1xf32>
    %c0_9 = arith.constant 0 : index
    %c0_10 = arith.constant 0 : index
    %26 = vector.load %arg7[%c0_9, %c0_10] : memref<1x1xf32, #tpu.memory_space<vmem>>, vector<1x1xf32>
    tpu.vector_store %arg7[%c0_9, %c0_10], %25 {strides = array<i32>} : memref<1x1xf32, #tpu.memory_space<vmem>>, vector<1x1xf32>,
    %cst_11 = arith.constant dense<0xFF800000> : vector<8xf32>
    %27 = vector.multi_reduction <maximumf>, %9, %cst_11 [0] : vector<8x8xf32> to vector<8xf32>
    %28 = vector.shape_cast %27 : vector<8xf32> to vector<1x8xf32>
    %c0_12 = arith.constant 0 : index
    %c0_13 = arith.constant 0 : index
    %29 = vector.load %arg5[%c0_12, %c0_13] : memref<1x8xf32, #tpu.memory_space<vmem>>, vector<1x8xf32>
    %30 = arith.maximumf %29, %28 : vector<1x8xf32>
    %c0_14 = arith.constant 0 : index
    %c0_15 = arith.constant 0 : index
    %31 = vector.load %arg5[%c0_14, %c0_15] : memref<1x8xf32, #tpu.memory_space<vmem>>, vector<1x8xf32>
    %32 = arith.subf %31, %30 : vector<1x8xf32>
    %33 = math.exp %32 : vector<1x8xf32>
    %c0_16 = arith.constant 0 : index
    %c0_17 = arith.constant 0 : index
    %34 = vector.load %arg6[%c0_16, %c0_17] : memref<1x8xf32, #tpu.memory_space<vmem>>, vector<1x8xf32>
    %35 = arith.mulf %34, %33 : vector<1x8xf32>
    %36 = vector.broadcast %30 : vector<1x8xf32> to vector<8x8xf32>
    %37 = arith.subf %9, %36 : vector<8x8xf32>
    %38 = math.exp %37 : vector<8x8xf32>
    %cst_18 = arith.constant dense<0.000000e+00> : vector<8xf32>
    %39 = vector.multi_reduction <add>, %38, %cst_18 [0] : vector<8x8xf32> to vector<8xf32>
    %40 = vector.shape_cast %39 : vector<8xf32> to vector<1x8xf32>
    %41 = arith.addf %35, %40 : vector<1x8xf32>
    %c0_19 = arith.constant 0 : index
    %c0_20 = arith.constant 0 : index
    %42 = vector.load %arg6[%c0_19, %c0_20] : memref<1x8xf32, #tpu.memory_space<vmem>>, vector<1x8xf32>
    tpu.vector_store %arg6[%c0_19, %c0_20], %41 {strides = array<i32>} : memref<1x8xf32, #tpu.memory_space<vmem>>, vector<1x8xf32>,
    %c0_21 = arith.constant 0 : index
    %c0_22 = arith.constant 0 : index
    %43 = vector.load %arg5[%c0_21, %c0_22] : memref<1x8xf32, #tpu.memory_space<vmem>>, vector<1x8xf32>
    tpu.vector_store %arg5[%c0_21, %c0_22], %30 {strides = array<i32>} : memref<1x8xf32, #tpu.memory_space<vmem>>, vector<1x8xf32>,
    %c0_23 = arith.constant 0 : index
    %c0_24 = arith.constant 0 : index
    %44 = vector.load %arg3[%c0_23, %c0_24] : memref<8x8xf32, #tpu.memory_space<vmem>>, vector<8x8xf32>
    %45 = vector.broadcast %6 : f32 to vector<8x8xf32>
    %46 = arith.mulf %44, %45 : vector<8x8xf32>
    %47 = tpu.iota {dimensions = array<i32: 0>} : vector<8x8xi32>
    %48 = tpu.iota {dimensions = array<i32: 1>} : vector<8x8xi32>
    %c0_25 = arith.constant 0 : index
    %c0_26 = arith.constant 0 : index
    %49 = vector.load %arg8[%c0_25, %c0_26] : memref<1x1xf32, #tpu.memory_space<vmem>>, vector<1x1xf32>
    %50 = arith.cmpi eq, %47, %48 : vector<8x8xi32>
    %cst_27 = arith.constant 0.000000e+00 : f32
    %51 = vector.broadcast %cst_27 : f32 to vector<8x8xf32>
    %52 = arith.select %50, %46, %51 : vector<8x8xi1>, vector<8x8xf32>
    %53 = vector.shape_cast %52 : vector<8x8xf32> to vector<1x8x8xf32>
    %cst_28 = arith.constant dense<0.000000e+00> : vector<1xf32>
    %54 = vector.multi_reduction <add>, %53, %cst_28 [1, 2] : vector<1x8x8xf32> to vector<1xf32>
    %55 = vector.shape_cast %54 : vector<1xf32> to vector<1x1x1xf32>
    %56 = vector.extract %55[0, 0, 0] : f32 from vector<1x1x1xf32>
    %57 = vector.broadcast %56 : f32 to vector<1x1xf32>
    %58 = arith.addf %49, %57 : vector<1x1xf32>
    %c0_29 = arith.constant 0 : index
    %c0_30 = arith.constant 0 : index
    %59 = vector.load %arg8[%c0_29, %c0_30] : memref<1x1xf32, #tpu.memory_space<vmem>>, vector<1x1xf32>
    tpu.vector_store %arg8[%c0_29, %c0_30], %58 {strides = array<i32>} : memref<1x1xf32, #tpu.memory_space<vmem>>, vector<1x1xf32>,
    %c0_i32_31 = arith.constant 0 : i32
    %60 = arith.cmpi eq, %arg0, %c0_i32_31 : i32
    %61 = arith.extui %60 : i1 to i32
    %c0_i32_32 = arith.constant 0 : i32
    %62 = arith.cmpi ne, %61, %c0_i32_32 : i32
    scf.if %62 {
      %c0_33 = arith.constant 0 : index
      %c0_34 = arith.constant 0 : index
      %63 = vector.load %arg6[%c0_33, %c0_34] : memref<1x8xf32, #tpu.memory_space<vmem>>, vector<1x8xf32>
      %64 = math.log %63 : vector<1x8xf32>
      %c0_35 = arith.constant 0 : index
      %c0_36 = arith.constant 0 : index
      %65 = vector.load %arg5[%c0_35, %c0_36] : memref<1x8xf32, #tpu.memory_space<vmem>>, vector<1x8xf32>
      %66 = arith.addf %64, %65 : vector<1x8xf32>
      %c0_37 = arith.constant 0 : index
      %c0_38 = arith.constant 0 : index
      %67 = vector.load %arg7[%c0_37, %c0_38] : memref<1x1xf32, #tpu.memory_space<vmem>>, vector<1x1xf32>
      %68 = vector.shape_cast %66 : vector<1x8xf32> to vector<1x1x8xf32>
      %cst_39 = arith.constant dense<0.000000e+00> : vector<1xf32>
      %69 = vector.multi_reduction <add>, %68, %cst_39 [1, 2] : vector<1x1x8xf32> to vector<1xf32>
      %70 = vector.shape_cast %69 : vector<1xf32> to vector<1x1x1xf32>
      %71 = vector.extract %70[0, 0, 0] : f32 from vector<1x1x1xf32>
      %72 = vector.broadcast %71 : f32 to vector<1x1xf32>
      %73 = arith.addf %67, %72 : vector<1x1xf32>
      %cst_40 = arith.constant 5.000000e-01 : f32
      %74 = vector.broadcast %cst_40 : f32 to vector<1x1xf32>
      %75 = arith.mulf %74, %73 : vector<1x1xf32>
      %c0_41 = arith.constant 0 : index
      %c0_42 = arith.constant 0 : index
      %76 = vector.load %arg8[%c0_41, %c0_42] : memref<1x1xf32, #tpu.memory_space<vmem>>, vector<1x1xf32>
      %77 = arith.subf %75, %76 : vector<1x1xf32>
      %cst_43 = arith.constant 8.000000e+00 : f32
      %78 = vector.broadcast %cst_43 : f32 to vector<1x1xf32>
      %79 = arith.divf %77, %78 : vector<1x1xf32>
      %c0_44 = arith.constant 0 : index
      %c0_45 = arith.constant 0 : index
      %80 = vector.load %arg4[%c0_44, %c0_45] : memref<1x1xf32, #tpu.memory_space<vmem>>, vector<1x1xf32>
      tpu.vector_store %arg4[%c0_44, %c0_45], %79 {strides = array<i32>} : memref<1x1xf32, #tpu.memory_space<vmem>>, vector<1x1xf32>,
    } else {
    }
    return
  }
  func.func @transform_0(%arg0: i32) -> i32 {
    %c0_i32 = arith.constant 0 : i32
    %c0_i32_0 = arith.constant 0 : i32
    return %c0_i32 : i32
  }
  func.func @transform_1(%arg0: i32) -> (i32, i32) {
    %c0_i32 = arith.constant 0 : i32
    %c0_i32_0 = arith.constant 0 : i32
    return %arg0, %c0_i32 : i32, i32
  }
  func.func @transform_2(%arg0: i32) -> (i32, i32) {
    %c0_i32 = arith.constant 0 : i32
    return %arg0, %arg0 : i32, i32
  }
  func.func @transform_3(%arg0: i32) -> (i32, i32) {
    %c0_i32 = arith.constant 0 : i32
    %c0_i32_0 = arith.constant 0 : i32
    %c0_i32_1 = arith.constant 0 : i32
    return %c0_i32, %c0_i32_0 : i32, i32
  }
}

</mosaic_0001>

<llo_original>
// kernel: tpu_custom_call.1
$region0: #{tpu_custom_call.1}
  #allocation0 [shape = 'u32[]', space=smem, size = 0x4, offset = 0x4, fixed_abs, tag = 'smem constant byte address 0x4 - core index']
  #allocation1 [shape = 'u32[72,128]{1,0:T(1,128)}', space=vmem, size = 0x9000, scoped, tag = 'internal scratch']
  #allocation2 [shape = 'f32[1,8]{1,0:T(1,128)}', space=vmem, size = 0x200, scoped, tag = 'scratch operand']
  #allocation3 [shape = 'f32[1,8]{1,0:T(1,128)}', space=vmem, size = 0x200, scoped, tag = 'scratch operand']
  #allocation4 [shape = 'f32[1,1]{1,0:T(1,128)}', space=vmem, size = 0x200, scoped, tag = 'scratch operand']
  #allocation5 [shape = 'f32[1,1]{1,0:T(1,128)}', space=vmem, size = 0x200, scoped, tag = 'scratch operand']
  #allocation6 [shape = 'f32[1]{0:T(128)S(6)}', space=smem, size = 0x200, scoped, tag = 'scoped memory for tpu_custom_call.1']
  %s0 = inlined_call_operand.<no memory space> [shape: f32[1], index: 0, kind: input, shape index: {}]
  %s1 = inlined_call_operand.hbm [shape: f32[8,8], index: 1, kind: input, shape index: {}]
  %s2 = inlined_call_operand.hbm [shape: f32[8,8], index: 2, kind: input, shape index: {}]
  %s3 = inlined_call_operand.hbm [shape: f32[1,1], index: 3, kind: output, shape index: {}]
  %s4 = sld [smem:[#allocation0]]
  $region38: #{tpu_custom_call.1} parent=0
    _
  %s6 = ssub.s32 1, %s4
  %s7 = scalar_select 0, %s6, %s4
  %8 = sst [smem:[#allocation6]] %s0
  $region1: #{tpu_custom_call.1} parent=0
    #allocation7 [shape = 'u8[4096]{0}', space=vmem, size = 0x1000, scoped, tag = 'input window, operand 1, single buffered']
    #allocation8 [shape = 's32[1]{0}', space=sflag, size = 0x4, scoped, tag = 'scoped memory for tpu_custom_call.1']
    #allocation9 [shape = 's32[1]{0}', space=sflag, size = 0x4, scoped, tag = 'scoped memory for tpu_custom_call.1']
    #allocation10 [shape = 'u8[4096]{0}', space=vmem, size = 0x1000, scoped, tag = 'input window, operand 2, single buffered']
    #allocation11 [shape = 's32[1]{0}', space=sflag, size = 0x4, scoped, tag = 'scoped memory for tpu_custom_call.1']
    #allocation12 [shape = 'u8[512]{0}', space=vmem, size = 0x400, scoped, tag = 'output window, operand 0, single buffered']
    %9 = vsyncpa [#allocation8], 0
    %10 = vsyncpa [#allocation11], 0
    %11 = vsyncpa [#allocation9], 0
    // Predicated region
    $region2: #{tpu_custom_call.1} parent=1 // pred_check
      _
    $region3: #{tpu_custom_call.1} parent=1 // pred_check_branch
      %13 = sbr.rel (0) target = $region5
    $region4: #{tpu_custom_call.1} parent=1 // pred_region
      _
    $region5: #{tpu_custom_call.1} parent=1 // pred_fallthru
      _
    // Predicated region
    $region6: #{tpu_custom_call.1} parent=1 // pred_check
      _
    $region7: #{tpu_custom_call.1} parent=1 // pred_check_branch
      %15 = sbr.rel (0) target = $region9
    $region8: #{tpu_custom_call.1} parent=1 // pred_region
      %17 = vsyncadd [#allocation8], 0
      %s19 = sshll.u32 %s1, 4
      %s20 = int_to_ptr.hbm [resolvable:$true] %s19
      %s21 = sshll.u32 [#allocation7], 4
      %s22 = int_to_ptr.vmem [resolvable:$true] %s21
      %24 = dma.hbm_to_vmem [thread:$0]  %s20, 128, %s22, [#allocation8]
    $region9: #{tpu_custom_call.1} parent=1 // pred_fallthru
      _
    // Predicated region
    $region10: #{tpu_custom_call.1} parent=1 // pred_check
      _
    $region11: #{tpu_custom_call.1} parent=1 // pred_check_branch
      %26 = sbr.rel (0) target = $region13
    $region12: #{tpu_custom_call.1} parent=1 // pred_region
      %28 = vsyncadd [#allocation11], 0
      %s30 = sshll.u32 %s2, 4
      %s31 = int_to_ptr.hbm [resolvable:$true] %s30
      %s32 = sshll.u32 [#allocation10], 4
      %s33 = int_to_ptr.vmem [resolvable:$true] %s32
      %35 = dma.hbm_to_vmem [thread:$0]  %s31, 128, %s33, [#allocation11]
    $region13: #{tpu_custom_call.1} parent=1 // pred_fallthru
      _
    // Predicated region
    $region14: #{tpu_custom_call.1} parent=1 // pred_check
      _
    $region15: #{tpu_custom_call.1} parent=1 // pred_check_branch
      %37 = sbr.rel (0) target = $region17
    $region16: #{tpu_custom_call.1} parent=1 // pred_region
      %39 = dma.done [#allocation8], 128
    $region17: #{tpu_custom_call.1} parent=1 // pred_fallthru
      _
    // Predicated region
    $region18: #{tpu_custom_call.1} parent=1 // pred_check
      _
    $region19: #{tpu_custom_call.1} parent=1 // pred_check_branch
      %41 = sbr.rel (0) target = $region21
    $region20: #{tpu_custom_call.1} parent=1 // pred_region
      %43 = dma.done [#allocation11], 128
    $region21: #{tpu_custom_call.1} parent=1 // pred_fallthru
      _
    %p44 = scmp.eq.s32.totalorder 0, 0
    // Predicated region
    $region22: #{tpu_custom_call.1} parent=1 // pred_check
      %p45 = pneg %p44
    $region23: #{tpu_custom_call.1} parent=1 // pred_check_branch
      %47 = sbr.rel (%p45) target = $region25
    $region24: #{tpu_custom_call.1} parent=1 // pred_region
      %vm48 = vcmask 57344
      %49 = vst.msk [vmem:[#allocation2] sm:$0x1] %vm48, -inf
      %50 = vst.msk [vmem:[#allocation3] sm:$0x1] %vm48, 0.0
      %vm51 = vcmask 0
      %52 = vst.msk [vmem:[#allocation4] sm:$0x1] %vm51, 0.0
      %53 = vst.msk [vmem:[#allocation5] sm:$0x1] %vm51, 0.0
      %54 = vst.msk [vmem:[#allocation12] sm:$0x1] %vm51, 0.0
    $region25: #{tpu_custom_call.1} parent=1 // pred_fallthru
      _
    %s55 = sld [smem:[#allocation6]]
    %s56 = ssub.f32 0.0, %s55
    %v57 = vstv %s56
    %v58 = vmul.f32 %v57, 1.442695
    %v59 = vpow.pop %v58
    %s60 = vtos %v59
    %s61 = sadd.f32 %s60, 1.0
    %v62 = vld [vmem:[#allocation7] sm:$0xff]
    %v63 = vstv %s61
    %v64 = vmul.f32 %v62, %v63
    %vm65 = vcmask 64512
    %v66 = vsel %vm65, %v64, -inf
    %67 = vmax.xlane.f32.xlu0 %v66
    %v68 = vpop.xlane.xlu0 %67
    %v69 = vsub.f32 %v64, %v68
    %v70 = vmul.f32 %v69, 1.442695
    %v71 = vpow.pop %v70
    %v72 = vsel %vm65, %v71, 0.0
    %73 = vadd.xlane.f32.xlu0 %v72
    %v74 = vpop.xlane.xlu0 %73
    %v75 = vlog2.pop %v74
    %v76 = vmul.f32 %v75, 0.6931472
    %v77 = vadd.f32 %v76, %v68
    %v78 = vld [vmem:[#allocation4] sm:$0x1]
    %vm79 = vcmask 7168
    %v80 = vsel %vm79, %v77, 0.0
    %81 = vadd.xlane.f32.xlu0 %v80
    %v82 = vpop.xlane.xlu0 %81
    %v83 = vrot.slane %v82, 4
    %v84 = vadd.f32 %v82, %v83
    %v85 = vrot.slane %v84, 2
    %v86 = vadd.f32 %v84, %v85
    %v87 = vrot.slane %v86, 1
    %v88 = vadd.f32 %v86, %v87
    %s89 = vtos %v88
    %v90 = vstv %s89
    %v91 = vadd.f32 %v78, %v90
    %vm92 = vcmask 0
    %93 = vst.msk [vmem:[#allocation4] sm:$0x1] %vm92, %v91
    %v94 = vrot.slane %v66, 4
    %v95 = vmax.f32 %v66, %v94
    %v96 = vrot.slane %v95, 2
    %v97 = vmax.f32 %v95, %v96
    %v98 = vrot.slane %v97, 1
    %v99 = vmax.f32 %v97, %v98
    %v100 = vld [vmem:[#allocation2] sm:$0x1]
    %v101 = vmax.f32 %v100, %v99
    %v102 = vsub.f32 %v100, %v101
    %v103 = vmul.f32 %v102, 1.442695
    %v104 = vpow.pop %v103
    %v105 = vld [vmem:[#allocation3] sm:$0x1]
    %v106 = vmul.f32 %v105, %v104
    %v108 = vperm.slane %v101, 0
    %v110 = vsub.f32 %v64, %v108
    %v111 = vmul.f32 %v110, 1.442695
    %v112 = vpow.pop %v111
    %v113 = vsel %vm65, %v112, 0.0
    %v114 = vrot.slane %v113, 4
    %v115 = vadd.f32 %v113, %v114
    %v116 = vrot.slane %v115, 2
    %v117 = vadd.f32 %v115, %v116
    %v118 = vrot.slane %v117, 1
    %v119 = vadd.f32 %v117, %v118
    %v120 = vadd.f32 %v106, %v119
    %vm121 = vcmask 57344
    %122 = vst.msk [vmem:[#allocation3] sm:$0x1] %vm121, %v120
    %123 = vst.msk [vmem:[#allocation2] sm:$0x1] %vm121, %v101
    %v124 = vld [vmem:[#allocation10] sm:$0xff]
    %v125 = vmul.f32 %v124, %v63
    %v126 = vlaneseq
    %v127 = vshrl.u32 %v126, 7
    %v128 = vlaneseq
    %v129 = vand.u32 %v128, 127
    %v130 = vld [vmem:[#allocation5] sm:$0x1]
    %vm131 = vcmp.eq.s32.totalorder %v127, %v129
    %v132 = vsel %vm131, %v125, 0.0
    %v133 = vsel %vm65, %v132, 0.0
    %134 = vadd.xlane.f32.xlu0 %v133
    %v135 = vpop.xlane.xlu0 %134
    %v136 = vrot.slane %v135, 4
    %v137 = vadd.f32 %v135, %v136
    %v138 = vrot.slane %v137, 2
    %v139 = vadd.f32 %v137, %v138
    %v140 = vrot.slane %v139, 1
    %v141 = vadd.f32 %v139, %v140
    %s142 = vtos %v141
    %v143 = vstv %s142
    %v144 = vadd.f32 %v130, %v143
    %145 = vst.msk [vmem:[#allocation5] sm:$0x1] %vm92, %v144
    // Predicated region
    $region26: #{tpu_custom_call.1} parent=1 // pred_check
      %p146 = pneg %p44
    $region27: #{tpu_custom_call.1} parent=1 // pred_check_branch
      %148 = sbr.rel (%p146) target = $region29
    $region28: #{tpu_custom_call.1} parent=1 // pred_region
      %v149 = vld [vmem:[#allocation3] sm:$0x1]
      %v150 = vlog2.pop %v149
      %v151 = vmul.f32 %v150, 0.6931472
      %v152 = vld [vmem:[#allocation2] sm:$0x1]
      %v153 = vadd.f32 %v151, %v152
      %v154 = vld [vmem:[#allocation4] sm:$0x1]
      %v155 = vsel %vm121, %v153, 0.0
      %156 = vadd.xlane.f32.xlu0 %v155
      %v157 = vpop.xlane.xlu0 %156
      %v158 = vrot.slane %v157, 4
      %v159 = vadd.f32 %v157, %v158
      %v160 = vrot.slane %v159, 2
      %v161 = vadd.f32 %v159, %v160
      %v162 = vrot.slane %v161, 1
      %v163 = vadd.f32 %v161, %v162
      %s164 = vtos %v163
      %v165 = vstv %s164
      %v166 = vadd.f32 %v154, %v165
      %v167 = vmul.f32 %v166, 0.5
      %v168 = vld [vmem:[#allocation5] sm:$0x1]
      %v169 = vsub.f32 %v167, %v168
      %v170 = vrcp.pop 8.0
      %v171 = vmul.f32 8.0, %v170
      %v172 = vsub.f32 1.0, %v171
      %v173 = vmul.f32 %v170, %v172
      %v174 = vadd.f32 %v170, %v173
      %vm175 = vweird.f32 %v170
      %v176 = vsel %vm175, %v170, %v174
      %v177 = vmul.f32 %v169, %v176
      %178 = vst.msk [vmem:[#allocation12] sm:$0x1] %vm92, %v177
    $region29: #{tpu_custom_call.1} parent=1 // pred_fallthru
      _
    // Predicated region
    $region30: #{tpu_custom_call.1} parent=1 // pred_check
      _
    $region31: #{tpu_custom_call.1} parent=1 // pred_check_branch
      %180 = sbr.rel (0) target = $region33
    $region32: #{tpu_custom_call.1} parent=1 // pred_region
      %182 = vsyncadd [#allocation9], 0
      %s184 = sshll.u32 [#allocation12], 4
      %s185 = int_to_ptr.vmem [resolvable:$true] %s184
      %s186 = sshll.u32 %s3, 4
      %s187 = int_to_ptr.hbm [resolvable:$true] %s186
      %189 = dma.vmem_to_hbm [thread:$0]  %s185, 16, %s187, [#allocation9]
    $region33: #{tpu_custom_call.1} parent=1 // pred_fallthru
      _
    // Predicated region
    $region34: #{tpu_custom_call.1} parent=1 // pred_check
      _
    $region35: #{tpu_custom_call.1} parent=1 // pred_check_branch
      %191 = sbr.rel (0) target = $region37
    $region36: #{tpu_custom_call.1} parent=1 // pred_region
      %193 = dma.done [#allocation9], 16
    $region37: #{tpu_custom_call.1} parent=1 // pred_fallthru
      _
    %194 = vsyncpa [#allocation8], 1
    %195 = vsyncpa [#allocation11], 1
    %196 = vsyncpa [#allocation9], 1

</llo_original>
